<compile_context>
chip_gen: v7x
topology: tpu7x:2x2x1
jax: 0.10.0
libtpu: 0.0.40
codegen_flags: <defaults>
</compile_context>

<pallas_src>
import functools

import jax
import jax.numpy as jnp
from jax import lax
from jax.experimental import pallas as pl
from jax.experimental.pallas import tpu as pltpu

_LANE = 128
# Per-grid-step working-set budget (double-buffered in + out).  Conservative
# enough for v7x's 64 MiB physical VMEM; v5e/v6e (128 MiB) have headroom.
_DEFAULT_VMEM_BUDGET = 28 * 1024 * 1024
_VMEM_LIMIT_BYTES = 48 * 1024 * 1024


def _round_up(x, m):
    return (x + m - 1) // m * m


def _choose_pack(batch, per_image_bytes, budget_bytes):
    """Images packed per grid step: fill the VMEM budget, but keep >= 2 grid
    steps when the batch allows so v7x megacore has work for both cores."""
    max_pack = max(1, int(budget_bytes // max(1, per_image_bytes)))
    if batch >= 2:
        max_pack = min(max_pack, batch // 2)
    max_pack = max(1, min(max_pack, batch))
    for cand in range(max_pack, 0, -1):       # largest divisor of batch
        if batch % cand == 0:
            return cand
    return 1


# ---------------------------------------------------------------------------
# Path A: whole images packed on the leading block axis.
# ---------------------------------------------------------------------------
def _packed_kernel(x_ref, w_ref, o_ref, *, n_pack, inv_hw):
    # x_ref: (n_pack, C, HWp)   -- n_pack whole images per grid step
    # w_ref: (Cout, C)          -- 1x1-conv weight, resident in VMEM
    # o_ref: (n_pack, Cout, HWp)
    w = w_ref[...].astype(jnp.float32)

    @pl.loop(0, n_pack)                        # real loop -> bounded live ranges
    def _(j):
        xj = x_ref[j]                          # (C, HWp), native dtype
        # Gram over the spatial axis: G = X X^T.  dot_general contracts the
        # shared HW axis directly (no transpose -> no XLU copies); f32 acc.
        g = lax.dot_general(xj, xj,
                            dimension_numbers=(((1,), (1,)), ((), ())),
                            preferred_element_type=jnp.float32)       # (C, C)
        # Fold the conv1x1 weight and the 1/(H*W) scale into a tiny matrix.
        m = jnp.dot(w, g, preferred_element_type=jnp.float32) * inv_hw
        # Cast M to the activation dtype so the big matmul is native bf16 on
        # the MXU when x is bf16 (no-op for f32 inputs).
        m = m.astype(xj.dtype)
        o_ref[j] = jnp.dot(m, xj,
                           preferred_element_type=jnp.float32).astype(o_ref.dtype)


def _run_packed(x_flat, w, hw, inv_hw, budget_bytes):
    B, C, _ = x_flat.shape
    Cout = w.shape[0]
    isz = x_flat.dtype.itemsize

    # Lane-dense spatial axis: pad HW up to a multiple of 128 when HW >= 128
    # (zero columns change neither the Gram nor the kept output columns).
    # For HW < 128 padding would inflate HBM traffic; accept masked stores.
    if hw >= _LANE and hw % _LANE != 0:
        hwp = _round_up(hw, _LANE)
        x_flat = jnp.pad(x_flat, ((0, 0), (0, 0), (0, hwp - hw)))
    else:
        hwp = hw

    per_image = 2 * (C + Cout) * hwp * isz          # double-buffered in + out
    n_pack = _choose_pack(B, per_image, budget_bytes)
    G = B // n_pack

    kernel = functools.partial(_packed_kernel, n_pack=n_pack, inv_hw=inv_hw)
    cost = pl.CostEstimate(
        flops=int(2 * B * (C * C * hw + Cout * C * C + Cout * C * hw)),
        transcendentals=0,
        bytes_accessed=int((B * (C + Cout) * hwp + Cout * C) * isz))

    out = pl.pallas_call(
        kernel,
        out_shape=jax.ShapeDtypeStruct((B, Cout, hwp), x_flat.dtype),
        grid_spec=pltpu.PrefetchScalarGridSpec(
            num_scalar_prefetch=0,
            grid=(G,),
            in_specs=[
                # Pack on the leading block axis: no host-side transposes.
                pl.BlockSpec((n_pack, C, hwp), lambda g: (g, 0, 0)),
                # Constant index_map -> weight stays resident in VMEM.
                pl.BlockSpec((Cout, C), lambda g: (0, 0)),
            ],
            out_specs=pl.BlockSpec((n_pack, Cout, hwp), lambda g: (g, 0, 0)),
        ),
        compiler_params=pltpu.CompilerParams(
            dimension_semantics=("parallel",),        # batch axis -> megacore
            vmem_limit_bytes=_VMEM_LIMIT_BYTES),
        cost_estimate=cost,
    )(x_flat, w)

    return out[:, :, :hw] if hwp != hw else out


# ---------------------------------------------------------------------------
# Path B: two-pass, HW-tiled (for images too large for one VMEM block).
# ---------------------------------------------------------------------------
def _gram_kernel(x_ref, w_ref, m_ref, g_acc, *, inv_hw):
    # x_ref: (1, C, tk); w_ref: (Cout, C); m_ref: (1, Cout, C) f32
    k = pl.program_id(1)

    @pl.when(k == 0)
    def _():
        g_acc[...] = jnp.zeros_like(g_acc)

    xk = x_ref[0]
    g_acc[...] += lax.dot_general(xk, xk,
                                  dimension_numbers=(((1,), (1,)), ((), ())),
                                  preferred_element_type=jnp.float32)

    @pl.when(k == pl.num_programs(1) - 1)
    def _():
        w = w_ref[...].astype(jnp.float32)
        m_ref[0] = jnp.dot(w, g_acc[...],
                           preferred_element_type=jnp.float32) * inv_hw


def _apply_kernel(m_ref, x_ref, o_ref):
    # m_ref: (1, Cout, C) f32; x_ref: (1, C, tk); o_ref: (1, Cout, tk)
    xk = x_ref[0]
    m = m_ref[0].astype(xk.dtype)
    o_ref[0] = jnp.dot(m, xk,
                       preferred_element_type=jnp.float32).astype(o_ref.dtype)


def _run_hw_tiled(x_flat, w, hw, inv_hw, budget_bytes):
    B, C, _ = x_flat.shape
    Cout = w.shape[0]
    isz = x_flat.dtype.itemsize

    # Largest 128-multiple spatial tile that fits the budget, capped at the
    # 128-rounded image size.  Zero-padding the spatial axis is safe: zero
    # columns change neither the Gram nor the output columns we keep.
    tk = max(_LANE,
             int(budget_bytes // (2 * (C + Cout) * isz)) // _LANE * _LANE)
    tk = min(tk, _round_up(hw, _LANE))
    hwp = _round_up(hw, tk)
    if hwp != hw:
        x_flat = jnp.pad(x_flat, ((0, 0), (0, 0), (0, hwp - hw)))
    nk = hwp // tk

    # Pass 1: accumulate the per-image Gram over spatial tiles -> M = (W G)/HW.
    gram_kernel = functools.partial(_gram_kernel, inv_hw=inv_hw)
    m = pl.pallas_call(
        gram_kernel,
        out_shape=jax.ShapeDtypeStruct((B, Cout, C), jnp.float32),
        grid_spec=pltpu.PrefetchScalarGridSpec(
            num_scalar_prefetch=0,
            grid=(B, nk),
            in_specs=[
                pl.BlockSpec((1, C, tk), lambda b, k: (b, 0, k)),
                pl.BlockSpec((Cout, C), lambda b, k: (0, 0)),
            ],
            out_specs=pl.BlockSpec((1, Cout, C), lambda b, k: (b, 0, 0)),
            scratch_shapes=[pltpu.VMEM((C, C), jnp.float32)],
        ),
        compiler_params=pltpu.CompilerParams(
            dimension_semantics=("parallel", "arbitrary"),
            vmem_limit_bytes=_VMEM_LIMIT_BYTES),
        cost_estimate=pl.CostEstimate(
            flops=int(2 * B * (C * C * hwp + Cout * C * C)),
            transcendentals=0,
            bytes_accessed=int(B * C * hwp * isz + B * Cout * C * 4
                               + Cout * C * isz)),
    )(x_flat, w)

    # Pass 2: stream X a second time and compute M @ X per spatial tile.
    out = pl.pallas_call(
        _apply_kernel,
        out_shape=jax.ShapeDtypeStruct((B, Cout, hwp), x_flat.dtype),
        grid_spec=pltpu.PrefetchScalarGridSpec(
            num_scalar_prefetch=0,
            grid=(B, nk),
            in_specs=[
                pl.BlockSpec((1, Cout, C), lambda b, k: (b, 0, 0)),
                pl.BlockSpec((1, C, tk), lambda b, k: (b, 0, k)),
            ],
            out_specs=pl.BlockSpec((1, Cout, tk), lambda b, k: (b, 0, k)),
        ),
        compiler_params=pltpu.CompilerParams(
            dimension_semantics=("parallel", "parallel"),
            vmem_limit_bytes=_VMEM_LIMIT_BYTES),
        cost_estimate=pl.CostEstimate(
            flops=int(2 * B * Cout * C * hwp),
            transcendentals=0,
            bytes_accessed=int(B * (C + Cout) * hwp * isz + B * Cout * C * 4)),
    )(m, x_flat)

    return out[:, :, :hw] if hwp != hw else out


# ---------------------------------------------------------------------------
# Public wrapper (semantics of DotProductNonLocalMeans.forward).
# ---------------------------------------------------------------------------
def dot_product_non_local_means(x, conv_weight, *,
                                vmem_budget_bytes=_DEFAULT_VMEM_BUDGET):
    """x: (B, C, H, W) NCHW; conv_weight: (Cout, Cin) (1x1 kernel squeezed)."""
    B, C, H, W = x.shape
    Cout, Cin = conv_weight.shape
    assert Cin == C
    hw = H * W
    inv_hw = 1.0 / float(hw)
    isz = x.dtype.itemsize

    x_flat = x.reshape(B, C, hw)

    hwp_est = _round_up(hw, _LANE) if hw >= _LANE else hw
    per_image_bytes = 2 * (C + Cout) * hwp_est * isz

    if per_image_bytes <= vmem_budget_bytes:
        out_flat = _run_packed(x_flat, conv_weight, hw, inv_hw, vmem_budget_bytes)
    else:
        out_flat = _run_hw_tiled(x_flat, conv_weight, hw, inv_hw, vmem_budget_bytes)
    return out_flat.reshape(B, Cout, H, W)


def _reference(x, conv_weight):
    # Mirrors the original (un-reassociated) PyTorch math to validate the
    # reassociation inside the kernels.
    B, C, H, W = x.shape
    hw = H * W
    xf = x.reshape(B, C, hw).astype(jnp.float32)
    f = jnp.einsum("bcp,bcq->bpq", xf, xf) / hw
    y = jnp.einsum("bcp,bpq->bcq", xf, f)
    out = jnp.einsum("oc,bcq->boq", conv_weight.astype(jnp.float32), y)
    return out.reshape(B, -1, H, W).astype(x.dtype)


if __name__ == "__main__":
    key = jax.random.PRNGKey(0)
    kx, kw, kx2 = jax.random.split(key, 3)

    # Module hardcodes a 64->64 1x1 conv, so channels must be 64.
    conv_weight = jax.random.normal(kw, (64, 64), dtype=jnp.float32) * 0.05

    # Path A (packed whole images), small spatial size (HW = 64 < 128).
    B, C, H, W = 4, 64, 8, 8
    x = jax.random.normal(kx, (B, C, H, W), dtype=jnp.float32)
    out = jax.block_until_ready(dot_product_non_local_means(x, conv_weight))
    ref = _reference(x, conv_weight)
    assert out.shape == (B, 64, H, W)
    assert jnp.allclose(out, ref, atol=1e-3, rtol=1e-3), "packed path mismatch"

    # Path B (HW-tiled two-pass): force it with a tiny VMEM budget and a
    # spatial size that is not a multiple of 128 (exercises zero-padding and
    # the Gram accumulation over multiple tiles).
    B2, H2, W2 = 2, 16, 25        # HW = 400 -> padded to 512, 4 tiles of 128
    x2 = jax.random.normal(kx2, (B2, 64, H2, W2), dtype=jnp.float32)
    out2 = jax.block_until_ready(
        dot_product_non_local_means(x2, conv_weight,
                                    vmem_budget_bytes=128 * 1024))
    ref2 = _reference(x2, conv_weight)
    assert out2.shape == (B2, 64, H2, W2)
    assert jnp.allclose(out2, ref2, atol=1e-3, rtol=1e-3), "tiled path mismatch"

    print("KERNEL_OK")
</pallas_src>

<mosaic_0001>
module attributes {stable_mosaic.version = 11 : i64} {
  func.func @_packed_kernel(%arg0: i32, %arg1: memref<2x64x64xf32, #tpu.memory_space<vmem>>, %arg2: memref<64x64xf32, #tpu.memory_space<vmem>>, %arg3: memref<2x64x64xf32, #tpu.memory_space<vmem>>) attributes {dimension_semantics = [#tpu.dimension_semantics<parallel>], iteration_bounds = array<i64: 2>, scalar_prefetch = 0 : i64, scratch_operands = 0 : i64, tpu.core_type = #tpu.core_type<tc>, window_params = [{transform_indices = @transform_0, window_bounds = array<i64: 2, 64, 64>}, {pipeline_mode = #tpu.pipeline_mode<synchronous>, transform_indices = @transform_1, window_bounds = array<i64: 64, 64>}, {transform_indices = @transform_2, window_bounds = array<i64: 2, 64, 64>}]} {
    %c0 = arith.constant 0 : index
    %c0_0 = arith.constant 0 : index
    %0 = vector.load %arg2[%c0, %c0_0] : memref<64x64xf32, #tpu.memory_space<vmem>>, vector<64x64xf32>
    %c0_i32 = arith.constant 0 : i32
    %c2_i32 = arith.constant 2 : i32
    %1 = arith.addi %c0_i32, %c2_i32 : i32
    %c1_i32 = arith.constant 1 : i32
    scf.for %arg4 = %c0_i32 to %1 step %c1_i32  : i32 {
      %c1_i32_2 = arith.constant 1 : i32
      %2 = arith.muli %arg4, %c1_i32_2 : i32
      %c0_i32_3 = arith.constant 0 : i32
      %3 = arith.addi %c0_i32_3, %2 : i32
      %4 = arith.index_cast %3 : i32 to index
      %c0_4 = arith.constant 0 : index
      %c0_5 = arith.constant 0 : index
      %5 = vector.load %arg1[%4, %c0_4, %c0_5] : memref<2x64x64xf32, #tpu.memory_space<vmem>>, vector<1x64x64xf32>
      %6 = vector.shape_cast %5 : vector<1x64x64xf32> to vector<64x64xf32>
      %cst = arith.constant dense<0.000000e+00> : vector<64x64xf32>
      %7 = tpu.matmul %6, %6, %cst {dimension_numbers = #tpu.dot_dimension_numbers<[1], [1], [0], [0], [0, 0, 1, 0], [], []>} : vector<64x64xf32>, vector<64x64xf32>, vector<64x64xf32> -> vector<64x64xf32>
      %cst_6 = arith.constant dense<0.000000e+00> : vector<64x64xf32>
      %8 = tpu.matmul %0, %7, %cst_6 {dimension_numbers = #tpu.dot_dimension_numbers<[1], [0], [0], [1], [0, 0, 1, 1], [], []>} : vector<64x64xf32>, vector<64x64xf32>, vector<64x64xf32> -> vector<64x64xf32>
      %cst_7 = arith.constant 1.562500e-02 : f32
      %9 = vector.broadcast %cst_7 : f32 to vector<64x64xf32>
      %10 = arith.mulf %8, %9 : vector<64x64xf32>
      %cst_8 = arith.constant dense<0.000000e+00> : vector<64x64xf32>
      %11 = tpu.matmul %10, %6, %cst_8 {dimension_numbers = #tpu.dot_dimension_numbers<[1], [0], [0], [1], [0, 0, 1, 1], [], []>} : vector<64x64xf32>, vector<64x64xf32>, vector<64x64xf32> -> vector<64x64xf32>
      %12 = arith.index_cast %3 : i32 to index
      %c0_9 = arith.constant 0 : index
      %c0_10 = arith.constant 0 : index
      %13 = vector.load %arg3[%12, %c0_9, %c0_10] : memref<2x64x64xf32, #tpu.memory_space<vmem>>, vector<1x64x64xf32>
      %14 = vector.shape_cast %13 : vector<1x64x64xf32> to vector<64x64xf32>
      %15 = vector.shape_cast %11 : vector<64x64xf32> to vector<1x64x64xf32>
      tpu.vector_store %arg3[%12, %c0_9, %c0_10], %15 {strides = array<i32>} : memref<2x64x64xf32, #tpu.memory_space<vmem>>, vector<1x64x64xf32>,
    }
    %c2_i32_1 = arith.constant 2 : i32
    return
  }
  func.func @transform_0(%arg0: i32) -> (i32, i32, i32) {
    %c0_i32 = arith.constant 0 : i32
    %c0_i32_0 = arith.constant 0 : i32
    %c0_i32_1 = arith.constant 0 : i32
    return %arg0, %c0_i32, %c0_i32_0 : i32, i32, i32
  }
  func.func @transform_1(%arg0: i32) -> (i32, i32) {
    %c0_i32 = arith.constant 0 : i32
    %c0_i32_0 = arith.constant 0 : i32
    %c0_i32_1 = arith.constant 0 : i32
    return %c0_i32, %c0_i32_0 : i32, i32
  }
  func.func @transform_2(%arg0: i32) -> (i32, i32, i32) {
    %c0_i32 = arith.constant 0 : i32
    %c0_i32_0 = arith.constant 0 : i32
    %c0_i32_1 = arith.constant 0 : i32
    return %arg0, %c0_i32, %c0_i32_0 : i32, i32, i32
  }
}

</mosaic_0001>

<llo_original>
// kernel: tpu_custom_call.1
$region0: #{tpu_custom_call.1}
  #allocation0 [shape = 'u32[]', space=smem, size = 0x4, offset = 0x4, fixed_abs, tag = 'smem constant byte address 0x4 - core index']
  #allocation1 [shape = 'u32[144,128]{1,0:T(1,128)}', space=vmem, size = 0x12000, scoped, tag = 'internal scratch']
  %s0 = inlined_call_operand.hbm [shape: f32[4,64,64], index: 0, kind: input, shape index: {}]
  %s1 = inlined_call_operand.hbm [shape: f32[64,64], index: 1, kind: input, shape index: {}]
  %s2 = inlined_call_operand.hbm [shape: f32[4,64,64], index: 2, kind: output, shape index: {}]
  %s3 = sld [smem:[#allocation0]]
  $region56: #{tpu_custom_call.1} parent=0
    _
  %s5 = ssub.s32 1, %s3
  %s6 = scalar_select 0, %s5, %s3
  $region1: #{tpu_custom_call.1} parent=0
    #allocation2 [shape = 'u8[131072]{0}', space=vmem, size = 0x20000, scoped, tag = 'input window, operand 0']
    #allocation3 [shape = 's32[2]{0}', space=sflag, size = 0x8, scoped, tag = 'scoped memory for tpu_custom_call.1']
    #allocation4 [shape = 's32[2]{0}', space=sflag, size = 0x8, scoped, tag = 'scoped memory for tpu_custom_call.1']
    #allocation5 [shape = 'u8[32768]{0}', space=vmem, size = 0x8000, scoped, tag = 'input window, operand 1, single buffered']
    #allocation6 [shape = 's32[1]{0}', space=sflag, size = 0x4, scoped, tag = 'scoped memory for tpu_custom_call.1']
    #allocation7 [shape = 'u8[131072]{0}', space=vmem, size = 0x20000, scoped, tag = 'output window, operand 0']
    %7 = vsyncpa [#allocation3], 0
    %s8 = scalar_lea.sflag [#allocation3], 1
    %9 = vsyncpa %s8, 0
    %10 = vsyncpa [#allocation6], 0
    %11 = vsyncpa [#allocation4], 0
    %s12 = scalar_lea.sflag [#allocation4], 1
    %13 = vsyncpa %s12, 0
    loop: start=0, step=1, limit=4
    $region2: #{tpu_custom_call.1} parent=1 // loop_pre_header
      _
    $region3: #{tpu_custom_call.1} parent=1 // loop_header
      %s15 = sphi 0, %s19
      %p16 = scmp.ge.s32.totalorder %s15, 4
      %s25 = sphi 0, %s27
      %s28 = sphi 0, %s25
      %s29 = sphi 0, %s28
      %s45 = sphi 0, %s29
      %s49 = sphi 0, %s49
      %s51 = sphi 0, %s49
      %s52 = sphi 0, %s51
      %s66 = sphi 0, %s52
      %s72 = sphi 0, %s74
      %s75 = sphi 0, %s72
      %s76 = sphi 0, %s75
      %s92 = sphi 0, %s76
    $region4: #{tpu_custom_call.1} parent=1 // loop_header_branch
      %18 = sbr.rel (%p16) target = $region8
    $region5: #{tpu_custom_call.1} parent=1 // loop_body
      %s20 = ssub.s32 %s15, 1
      %s21 = ssub.s32 %s15, 2
      %s22 = sadd.s32 %s15, 1
      %s23 = ssub.s32 %s15, %s22
      %p24 = scmp.eq.s32.totalorder %s23, 0
      %s26 = sadd.s32 %s25, 1
      %s27 = scalar_select %p24, %s25, %s26
      %p30 = pneg %p24
      %p31 = scmp.eq.s32.totalorder %s15, 1
      %p32 = por %p30, %p31
      %p33 = scmp.ne.s32.totalorder %s25, %s28
      %p34 = scmp.eq.s32.totalorder %s15, 0
      %p35 = por %p33, %p34
      %p36 = scmp.ne.s32.totalorder %s25, %s28
      %p37 = scmp.eq.s32.totalorder %s20, 1
      %p38 = por %p36, %p37
      %p39 = scmp.ne.s32.totalorder %s28, %s29
      %p40 = scmp.eq.s32.totalorder %s20, 0
      %p41 = por %p39, %p40
      %p42 = scmp.ne.s32.totalorder %s28, %s29
      %p43 = scmp.eq.s32.totalorder %s21, 1
      %p44 = por %p42, %p43
      %p46 = scmp.ne.s32.totalorder %s29, %s45
      %p47 = scmp.eq.s32.totalorder %s21, 0
      %p48 = por %p46, %p47
      %s50 = sadd.s32 %s49, 1
      %p53 = scmp.eq.s32.totalorder %s15, 1
      %p54 = scmp.ne.s32.totalorder %s49, %s51
      %p55 = scmp.eq.s32.totalorder %s15, 0
      %p56 = por %p54, %p55
      %p57 = scmp.ne.s32.totalorder %s49, %s51
      %p58 = scmp.eq.s32.totalorder %s20, 1
      %p59 = por %p57, %p58
      %p60 = scmp.ne.s32.totalorder %s51, %s52
      %p61 = scmp.eq.s32.totalorder %s20, 0
      %p62 = por %p60, %p61
      %p63 = scmp.ne.s32.totalorder %s51, %s52
      %p64 = scmp.eq.s32.totalorder %s21, 1
      %p65 = por %p63, %p64
      %p67 = scmp.ne.s32.totalorder %s52, %s66
      %p68 = scmp.eq.s32.totalorder %s21, 0
      %p69 = por %p67, %p68
      %s70 = ssub.s32 %s15, %s22
      %p71 = scmp.eq.s32.totalorder %s70, 0
      %s73 = sadd.s32 %s72, 1
      %s74 = scalar_select %p71, %s72, %s73
      %p77 = pneg %p71
      %p78 = scmp.eq.s32.totalorder %s15, 1
      %p79 = por %p77, %p78
      %p80 = scmp.ne.s32.totalorder %s72, %s75
      %p81 = scmp.eq.s32.totalorder %s15, 0
      %p82 = por %p80, %p81
      %p83 = scmp.ne.s32.totalorder %s72, %s75
      %p84 = scmp.eq.s32.totalorder %s20, 1
      %p85 = por %p83, %p84
      %p86 = scmp.ne.s32.totalorder %s75, %s76
      %p87 = scmp.eq.s32.totalorder %s20, 0
      %p88 = por %p86, %p87
      %p89 = scmp.ne.s32.totalorder %s75, %s76
      %p90 = scmp.eq.s32.totalorder %s21, 1
      %p91 = por %p89, %p90
      %p93 = scmp.ne.s32.totalorder %s76, %s92
      %p94 = scmp.eq.s32.totalorder %s21, 0
      %p95 = por %p93, %p94
      %p96 = scmp.le.s32.totalorder 1, %s15
      %p97 = scmp.lt.s32.totalorder %s15, 3
      %p98 = pnand %p96, %p97
      %p99 = pneg %p98
      // Predicated region
      $region9: #{tpu_custom_call.1} parent=5 // pred_check
        _
      $region10: #{tpu_custom_call.1} parent=5 // pred_check_branch
        %101 = sbr.rel (%p98) target = $region12
      $region11: #{tpu_custom_call.1} parent=5 // pred_region
        %s102 = ssub.s32 %s15, 1
        // Predicated region
        $region13: #{tpu_custom_call.1} parent=11 // pred_check
          %p103 = pneg %p62
        $region14: #{tpu_custom_call.1} parent=11 // pred_check_branch
          %105 = sbr.rel (%p103) target = $region16
        $region15: #{tpu_custom_call.1} parent=11 // pred_region
          %s107 = ssub.s32 1024, 1024
          %108 = vsyncadd [#allocation6], %s107
          %s109 = sshll.u32 [#allocation5], 4
          %s110 = int_to_ptr.vmem [resolvable:$true] %s109
          %115 = dma.hbm_to_vmem [thread:$0]  %s1, 1024, %s110, [#allocation6], 128, 128, 8
        $region16: #{tpu_custom_call.1} parent=11 // pred_fallthru
          _
      $region12: #{tpu_custom_call.1} parent=5 // pred_fallthru
        _
      %p116 = scmp.lt.s32.totalorder %s15, 2
      // Predicated region
      $region17: #{tpu_custom_call.1} parent=5 // pred_check
        %p117 = pneg %p116
      $region18: #{tpu_custom_call.1} parent=5 // pred_check_branch
        %119 = sbr.rel (%p117) target = $region20
      $region19: #{tpu_custom_call.1} parent=5 // pred_region
        // Predicated region
        $region21: #{tpu_custom_call.1} parent=19 // pred_check
          %p120 = pneg %p35
        $region22: #{tpu_custom_call.1} parent=19 // pred_check_branch
          %122 = sbr.rel (%p120) target = $region24
        $region23: #{tpu_custom_call.1} parent=19 // pred_region
          %s123 = sand.u32 %s25, 1
          %s124 = scalar_lea.sflag [#allocation3], %s123
          %s125 = sand.u32 %s25, 1
          %s126 = smul.addr %s125, 128
          %s127 = scalar_lea.vmem [#allocation2], %s126
          %s128 = smul.u32 2, %s15
          %s130 = ssub.s32 2048, 2048
          %131 = vsyncadd %s124, %s130
          %s132 = smul.addr %s128, 8
          %s133 = smul.addr %s132, 128
          %s134 = scalar_lea.hbm %s0, %s133
          %s135 = sshll.u32 %s127, 4
          %s136 = int_to_ptr.vmem [resolvable:$true] %s135
          %141 = dma.hbm_to_vmem [thread:$0]  %s134, 2048, %s136, %s124, 128, 128, 8
        $region24: #{tpu_custom_call.1} parent=19 // pred_fallthru
          _
      $region20: #{tpu_custom_call.1} parent=5 // pred_fallthru
        _
      %p142 = scmp.le.s32.totalorder 1, %s15
      %p143 = scmp.lt.s32.totalorder %s15, 3
      %p144 = pnand %p142, %p143
      %p145 = pneg %p144
      // Predicated region
      $region25: #{tpu_custom_call.1} parent=5 // pred_check
        _
      $region26: #{tpu_custom_call.1} parent=5 // pred_check_branch
        %147 = sbr.rel (%p144) target = $region28
      $region27: #{tpu_custom_call.1} parent=5 // pred_region
        %s148 = ssub.s32 %s15, 1
        %s149 = sand.u32 %s28, 1
        %s150 = scalar_lea.sflag [#allocation3], %s149
        %s151 = sand.u32 %s28, 1
        %s152 = smul.addr %s151, 128
        %s153 = scalar_lea.vmem [#allocation2], %s152
        // Predicated region
        $region29: #{tpu_custom_call.1} parent=27 // pred_check
          %p154 = pneg %p41
        $region30: #{tpu_custom_call.1} parent=27 // pred_check_branch
          %156 = sbr.rel (%p154) target = $region32
        $region31: #{tpu_custom_call.1} parent=27 // pred_region
          %157 = dma.done %s150, 2048
        $region32: #{tpu_custom_call.1} parent=27 // pred_fallthru
          _
        // Predicated region
        $region33: #{tpu_custom_call.1} parent=27 // pred_check
          %p158 = pneg %p62
        $region34: #{tpu_custom_call.1} parent=27 // pred_check_branch
          %160 = sbr.rel (%p158) target = $region36
        $region35: #{tpu_custom_call.1} parent=27 // pred_region
          %161 = dma.done [#allocation6], 1024
        $region36: #{tpu_custom_call.1} parent=27 // pred_fallthru
          _
        %s162 = sand.u32 %s28, 1
        %s163 = scalar_lea.sflag [#allocation3], %s162
        %s164 = sand.u32 %s28, 1
        %s165 = smul.addr %s164, 128
        %s166 = scalar_lea.vmem [#allocation2], %s165
        %p167 = pneg %p41
        %p168 = pneg %p38
        %p169 = pneg %p62
        %p170 = pneg %p59
        %p171 = pneg %p88
        %p172 = pneg %p85
        %s173 = sand.u32 %s75, 1
        %s174 = scalar_lea.sflag [#allocation4], %s173
        %s175 = sand.u32 %s75, 1
        %s176 = smul.addr %s175, 128
        %s177 = scalar_lea.vmem [#allocation7], %s176
        %s178 = smul.u32 2, %s20
        %s179 = smul.u32 2, %s20
        %v180 = vld [vmem:[#allocation5] sm:$0xff]
        %v181 = vld [vmem:[#allocation5 + $0x8] sm:$0xff]
        %v182 = vld [vmem:[#allocation5 + $0x10] sm:$0xff]
        %v183 = vld [vmem:[#allocation5 + $0x18] sm:$0xff]
        %v184 = vld [vmem:[#allocation5 + $0x20] sm:$0xff]
        %v185 = vld [vmem:[#allocation5 + $0x28] sm:$0xff]
        %v186 = vld [vmem:[#allocation5 + $0x30] sm:$0xff]
        %v187 = vld [vmem:[#allocation5 + $0x38] sm:$0xff]
        loop: start=0, step=1, limit=2
        $region37: #{tpu_custom_call.1} parent=27 // loop_pre_header
          _
        $region38: #{tpu_custom_call.1} parent=27 // loop_header
          %s189 = sphi 0, %s193
          %p190 = scmp.ge.s32.totalorder %s189, 2
        $region39: #{tpu_custom_call.1} parent=27 // loop_header_branch
          %192 = sbr.rel (%p190) target = $region43
        $region40: #{tpu_custom_call.1} parent=27 // loop_body
          %s194 = smul.u32 %s189, 64
          %s195 = scalar_lea.vmem %s153, %s194 [#allocation2]
          %v196 = vld [vmem:[%s195] sm:$0xff]
          %v197 = vld [vmem:[%s195 + $0x8] sm:$0xff]
          %v198 = vld [vmem:[%s195 + $0x10] sm:$0xff]
          %v199 = vld [vmem:[%s195 + $0x18] sm:$0xff]
          %v200 = vld [vmem:[%s195 + $0x20] sm:$0xff]
          %v201 = vld [vmem:[%s195 + $0x28] sm:$0xff]
          %v202 = vld [vmem:[%s195 + $0x30] sm:$0xff]
          %v203 = vld [vmem:[%s195 + $0x38] sm:$0xff]
          %vm204 = vcmask 523264
          %v206 = vsel %vm204, %v196, 0
          %v209 = vsel %vm204, %v197, 0
          %v212 = vsel %vm204, %v198, 0
          %v215 = vsel %vm204, %v199, 0
          %v218 = vsel %vm204, %v200, 0
          %v221 = vsel %vm204, %v201, 0
          %v224 = vsel %vm204, %v202, 0
          %v227 = vsel %vm204, %v203, 0
          %229 = vmatprep.subr.mxu0 0.0
          %230 = vmatpush1.xpose.msra.mxu0 %v206
          %231 = vmatprep.subr.mxu0 0.0
          %232 = vmatpush1.xpose.msra.mxu0 %v209
          %233 = vmatprep.subr.mxu0 0.0
          %234 = vmatpush1.xpose.msra.mxu0 %v212
          %235 = vmatprep.subr.mxu0 0.0
          %236 = vmatpush1.xpose.msra.mxu0 %v215
          %237 = vmatprep.subr.mxu0 0.0
          %238 = vmatpush1.xpose.msra.mxu0 %v218
          %239 = vmatprep.subr.mxu0 0.0
          %240 = vmatpush1.xpose.msra.mxu0 %v221
          %241 = vmatprep.subr.mxu0 0.0
          %242 = vmatpush1.xpose.msra.mxu0 %v224
          %243 = vmatprep.subr.mxu0 0.0
          %244 = vmatpush1.xpose.msra.mxu0 %v227
          %245 = vmatprep.subr.mxu0 0.0
          %246 = vmatpush1.xpose.msra.mxu0 0.0
          %247 = vmatprep.subr.mxu0 0.0
          %248 = vmatpush1.xpose.msra.mxu0 0.0
          %249 = vmatprep.subr.mxu0 0.0
          %250 = vmatpush1.xpose.msra.mxu0 0.0
          %251 = vmatprep.subr.mxu0 0.0
          %252 = vmatpush1.xpose.msra.mxu0 0.0
          %253 = vmatprep.subr.mxu0 0.0
          %254 = vmatpush1.xpose.msra.mxu0 0.0
          %255 = vmatprep.subr.mxu0 0.0
          %256 = vmatpush1.xpose.msra.mxu0 0.0
          %257 = vmatprep.subr.mxu0 0.0
          %258 = vmatpush1.xpose.msra.mxu0 0.0
          %259 = vmatprep.subr.mxu0 0.0
          %260 = vmatpush1.xpose.msra.mxu0 0.0
          %261 = vmatprep.subr.mxu0 0.0
          %262 = vmatpush1.xpose.msra.mxu0 0.0
          %263 = vmatprep.subr.mxu0 0.0
          %264 = vmatpush1.xpose.msra.mxu0 0.0
          %265 = vmatprep.subr.mxu0 0.0
          %266 = vmatpush1.xpose.msra.mxu0 0.0
          %267 = vmatprep.subr.mxu0 0.0
          %268 = vmatpush1.xpose.msra.mxu0 0.0
          %269 = vmatprep.subr.mxu0 0.0
          %270 = vmatpush1.xpose.msra.mxu0 0.0
          %271 = vmatprep.subr.mxu0 0.0
          %272 = vmatpush1.xpose.msra.mxu0 0.0
          %273 = vmatprep.subr.mxu0 0.0
          %274 = vmatpush1.xpose.msra.mxu0 0.0
          %275 = vmatprep.subr.mxu0 0.0
          %276 = vmatpush1.xpose.msra.mxu0 0.0
          %277 = vmatprep.subr.mxu0 0.0
          %278 = vmatpush1.xpose.msra.mxu0 0.0
          %279 = vmatprep.subr.mxu0 0.0
          %280 = vmatpush1.xpose.msra.mxu0 0.0
          %281 = vmatprep.subr.mxu0 0.0
          %282 = vmatpush1.xpose.msra.mxu0 0.0
          %283 = vmatprep.subr.mxu0 0.0
          %284 = vmatpush1.xpose.msra.mxu0 0.0
          %285 = vmatprep.subr.mxu0 0.0
          %286 = vmatpush1.xpose.msra.mxu0 0.0
          %287 = vmatprep.subr.mxu0 0.0
          %288 = vmatpush1.xpose.msra.mxu0 0.0
          %289 = vmatprep.subr.mxu0 0.0
          %290 = vmatpush1.xpose.msra.mxu0 0.0
          %291 = vmatprep.subr.mxu0 0.0
          %292 = vmatpush1.xpose.msra.mxu0 0.0
          %293 = vmatprep.mubr.f32.mxu0 0.0
          %294 = vmatmul.mubr.f32.gmra.mrb[0].mxu0 %v206
          %v295 = vpop.f32.mrb[0].mxu0
          %v296 = vadd.f32 0.0, %v295
          %v297 = vpop.f32.mrb[0].mxu0
          %298 = vmatprep.mubr.f32.mxu0 0.0
          %299 = vmatmul.mubr.f32.gmra.mrb[0].mxu0 %v209
          %v300 = vpop.f32.mrb[0].mxu0
          %v301 = vadd.f32 0.0, %v300
          %v302 = vpop.f32.mrb[0].mxu0
          %303 = vmatprep.mubr.f32.mxu0 0.0
          %304 = vmatmul.mubr.f32.gmra.mrb[0].mxu0 %v212
          %v305 = vpop.f32.mrb[0].mxu0
          %v306 = vadd.f32 0.0, %v305
          %v307 = vpop.f32.mrb[0].mxu0
          %308 = vmatprep.mubr.f32.mxu0 0.0
          %309 = vmatmul.mubr.f32.gmra.mrb[0].mxu0 %v215
          %v310 = vpop.f32.mrb[0].mxu0
          %v311 = vadd.f32 0.0, %v310
          %v312 = vpop.f32.mrb[0].mxu0
          %313 = vmatprep.mubr.f32.mxu0 0.0
          %314 = vmatmul.mubr.f32.gmra.mrb[0].mxu0 %v218
          %v315 = vpop.f32.mrb[0].mxu0
          %v316 = vadd.f32 0.0, %v315
          %v317 = vpop.f32.mrb[0].mxu0
          %318 = vmatprep.mubr.f32.mxu0 0.0
          %319 = vmatmul.mubr.f32.gmra.mrb[0].mxu0 %v221
          %v320 = vpop.f32.mrb[0].mxu0
          %v321 = vadd.f32 0.0, %v320
          %v322 = vpop.f32.mrb[0].mxu0
          %323 = vmatprep.mubr.f32.mxu0 0.0
          %324 = vmatmul.mubr.f32.gmra.mrb[0].mxu0 %v224
          %v325 = vpop.f32.mrb[0].mxu0
          %v326 = vadd.f32 0.0, %v325
          %v327 = vpop.f32.mrb[0].mxu0
          %328 = vmatprep.mubr.f32.mxu0 0.0
          %329 = vmatmul.mubr.f32.gmra.mrb[0].mxu0 %v227
          %v330 = vpop.f32.mrb[0].mxu0
          %v331 = vadd.f32 0.0, %v330
          %v332 = vpop.f32.mrb[0].mxu0
          %333 = vdwg.mxu0
          %v335 = vsel %vm204, %v180, 0
          %v338 = vsel %vm204, %v181, 0
          %v341 = vsel %vm204, %v182, 0
          %v344 = vsel %vm204, %v183, 0
          %v347 = vsel %vm204, %v184, 0
          %v350 = vsel %vm204, %v185, 0
          %v353 = vsel %vm204, %v186, 0
          %v356 = vsel %vm204, %v187, 0
          %358 = vmatprep.subr.mxu0 0.0
          %359 = vmatpush1.msra.mxu0 %v296
          %360 = vmatprep.subr.mxu0 0.0
          %361 = vmatpush1.msra.mxu0 %v301
          %362 = vmatprep.subr.mxu0 0.0
          %363 = vmatpush1.msra.mxu0 %v306
          %364 = vmatprep.subr.mxu0 0.0
          %365 = vmatpush1.msra.mxu0 %v311
          %366 = vmatprep.subr.mxu0 0.0
          %367 = vmatpush1.msra.mxu0 %v316
          %368 = vmatprep.subr.mxu0 0.0
          %369 = vmatpush1.msra.mxu0 %v321
          %370 = vmatprep.subr.mxu0 0.0
          %371 = vmatpush1.msra.mxu0 %v326
          %372 = vmatprep.subr.mxu0 0.0
          %373 = vmatpush1.msra.mxu0 %v331
          %374 = vmatprep.subr.mxu0 0.0
          %375 = vmatpush1.msra.mxu0 0.0
          %376 = vmatprep.subr.mxu0 0.0
          %377 = vmatpush1.msra.mxu0 0.0
          %378 = vmatprep.subr.mxu0 0.0
          %379 = vmatpush1.msra.mxu0 0.0
          %380 = vmatprep.subr.mxu0 0.0
          %381 = vmatpush1.msra.mxu0 0.0
          %382 = vmatprep.subr.mxu0 0.0
          %383 = vmatpush1.msra.mxu0 0.0
          %384 = vmatprep.subr.mxu0 0.0
          %385 = vmatpush1.msra.mxu0 0.0
          %386 = vmatprep.subr.mxu0 0.0
          %387 = vmatpush1.msra.mxu0 0.0
          %388 = vmatprep.subr.mxu0 0.0
          %389 = vmatpush1.msra.mxu0 0.0
          %390 = vmatprep.subr.mxu0 0.0
          %391 = vmatpush1.msra.mxu0 0.0
          %392 = vmatprep.subr.mxu0 0.0
          %393 = vmatpush1.msra.mxu0 0.0
          %394 = vmatprep.subr.mxu0 0.0
          %395 = vmatpush1.msra.mxu0 0.0
          %396 = vmatprep.subr.mxu0 0.0
          %397 = vmatpush1.msra.mxu0 0.0
          %398 = vmatprep.subr.mxu0 0.0
          %399 = vmatpush1.msra.mxu0 0.0
          %400 = vmatprep.subr.mxu0 0.0
          %401 = vmatpush1.msra.mxu0 0.0
          %402 = vmatprep.subr.mxu0 0.0
          %403 = vmatpush1.msra.mxu0 0.0
          %404 = vmatprep.subr.mxu0 0.0
          %405 = vmatpush1.msra.mxu0 0.0
          %406 = vmatprep.subr.mxu0 0.0
          %407 = vmatpush1.msra.mxu0 0.0
          %408 = vmatprep.subr.mxu0 0.0
          %409 = vmatpush1.msra.mxu0 0.0
          %410 = vmatprep.subr.mxu0 0.0
          %411 = vmatpush1.msra.mxu0 0.0
          %412 = vmatprep.subr.mxu0 0.0
          %413 = vmatpush1.msra.mxu0 0.0
          %414 = vmatprep.subr.mxu0 0.0
          %415 = vmatpush1.msra.mxu0 0.0
          %416 = vmatprep.subr.mxu0 0.0
          %417 = vmatpush1.msra.mxu0 0.0
          %418 = vmatprep.subr.mxu0 0.0
          %419 = vmatpush1.msra.mxu0 0.0
          %420 = vmatprep.subr.mxu0 0.0
          %421 = vmatpush1.msra.mxu0 0.0
          %422 = vmatprep.mubr.f32.mxu0 0.0
          %423 = vmatmul.mubr.f32.gmra.mrb[0].mxu0 %v335
          %v424 = vpop.f32.mrb[0].mxu0
          %v425 = vadd.f32 0.0, %v424
          %v426 = vpop.f32.mrb[0].mxu0
          %427 = vmatprep.mubr.f32.mxu0 0.0
          %428 = vmatmul.mubr.f32.gmra.mrb[0].mxu0 %v338
          %v429 = vpop.f32.mrb[0].mxu0
          %v430 = vadd.f32 0.0, %v429
          %v431 = vpop.f32.mrb[0].mxu0
          %432 = vmatprep.mubr.f32.mxu0 0.0
          %433 = vmatmul.mubr.f32.gmra.mrb[0].mxu0 %v341
          %v434 = vpop.f32.mrb[0].mxu0
          %v435 = vadd.f32 0.0, %v434
          %v436 = vpop.f32.mrb[0].mxu0
          %437 = vmatprep.mubr.f32.mxu0 0.0
          %438 = vmatmul.mubr.f32.gmra.mrb[0].mxu0 %v344
          %v439 = vpop.f32.mrb[0].mxu0
          %v440 = vadd.f32 0.0, %v439
          %v441 = vpop.f32.mrb[0].mxu0
          %442 = vmatprep.mubr.f32.mxu0 0.0
          %443 = vmatmul.mubr.f32.gmra.mrb[0].mxu0 %v347
          %v444 = vpop.f32.mrb[0].mxu0
          %v445 = vadd.f32 0.0, %v444
          %v446 = vpop.f32.mrb[0].mxu0
          %447 = vmatprep.mubr.f32.mxu0 0.0
          %448 = vmatmul.mubr.f32.gmra.mrb[0].mxu0 %v350
          %v449 = vpop.f32.mrb[0].mxu0
          %v450 = vadd.f32 0.0, %v449
          %v451 = vpop.f32.mrb[0].mxu0
          %452 = vmatprep.mubr.f32.mxu0 0.0
          %453 = vmatmul.mubr.f32.gmra.mrb[0].mxu0 %v353
          %v454 = vpop.f32.mrb[0].mxu0
          %v455 = vadd.f32 0.0, %v454
          %v456 = vpop.f32.mrb[0].mxu0
          %457 = vmatprep.mubr.f32.mxu0 0.0
          %458 = vmatmul.mubr.f32.gmra.mrb[0].mxu0 %v356
          %v459 = vpop.f32.mrb[0].mxu0
          %v460 = vadd.f32 0.0, %v459
          %v461 = vpop.f32.mrb[0].mxu0
          %462 = vdwg.mxu0
          %v463 = vmul.f32 %v425, 0.015625
          %v464 = vmul.f32 %v430, 0.015625
          %v465 = vmul.f32 %v435, 0.015625
          %v466 = vmul.f32 %v440, 0.015625
          %v467 = vmul.f32 %v445, 0.015625
          %v468 = vmul.f32 %v450, 0.015625
          %v469 = vmul.f32 %v455, 0.015625
          %v470 = vmul.f32 %v460, 0.015625
          %v472 = vsel %vm204, %v463, 0
          %v475 = vsel %vm204, %v464, 0
          %v478 = vsel %vm204, %v465, 0
          %v481 = vsel %vm204, %v466, 0
          %v484 = vsel %vm204, %v467, 0
          %v487 = vsel %vm204, %v468, 0
          %v490 = vsel %vm204, %v469, 0
          %v493 = vsel %vm204, %v470, 0
          %495 = vmatprep.subr.mxu0 0.0
          %496 = vmatpush1.msra.mxu0 %v196
          %497 = vmatprep.subr.mxu0 0.0
          %498 = vmatpush1.msra.mxu0 %v197
          %499 = vmatprep.subr.mxu0 0.0
          %500 = vmatpush1.msra.mxu0 %v198
          %501 = vmatprep.subr.mxu0 0.0
          %502 = vmatpush1.msra.mxu0 %v199
          %503 = vmatprep.subr.mxu0 0.0
          %504 = vmatpush1.msra.mxu0 %v200
          %505 = vmatprep.subr.mxu0 0.0
          %506 = vmatpush1.msra.mxu0 %v201
          %507 = vmatprep.subr.mxu0 0.0
          %508 = vmatpush1.msra.mxu0 %v202
          %509 = vmatprep.subr.mxu0 0.0
          %510 = vmatpush1.msra.mxu0 %v203
          %511 = vmatprep.subr.mxu0 0.0
          %512 = vmatpush1.msra.mxu0 0.0
          %513 = vmatprep.subr.mxu0 0.0
          %514 = vmatpush1.msra.mxu0 0.0
          %515 = vmatprep.subr.mxu0 0.0
          %516 = vmatpush1.msra.mxu0 0.0
          %517 = vmatprep.subr.mxu0 0.0
          %518 = vmatpush1.msra.mxu0 0.0
          %519 = vmatprep.subr.mxu0 0.0
          %520 = vmatpush1.msra.mxu0 0.0
          %521 = vmatprep.subr.mxu0 0.0
          %522 = vmatpush1.msra.mxu0 0.0
          %523 = vmatprep.subr.mxu0 0.0
          %524 = vmatpush1.msra.mxu0 0.0
          %525 = vmatprep.subr.mxu0 0.0
          %526 = vmatpush1.msra.mxu0 0.0
          %527 = vmatprep.subr.mxu0 0.0
          %528 = vmatpush1.msra.mxu0 0.0
          %529 = vmatprep.subr.mxu0 0.0
          %530 = vmatpush1.msra.mxu0 0.0
          %531 = vmatprep.subr.mxu0 0.0
          %532 = vmatpush1.msra.mxu0 0.0
          %533 = vmatprep.subr.mxu0 0.0
          %534 = vmatpush1.msra.mxu0 0.0
          %535 = vmatprep.subr.mxu0 0.0
          %536 = vmatpush1.msra.mxu0 0.0
          %537 = vmatprep.subr.mxu0 0.0
          %538 = vmatpush1.msra.mxu0 0.0
          %539 = vmatprep.subr.mxu0 0.0
          %540 = vmatpush1.msra.mxu0 0.0
          %541 = vmatprep.subr.mxu0 0.0
          %542 = vmatpush1.msra.mxu0 0.0
          %543 = vmatprep.subr.mxu0 0.0
          %544 = vmatpush1.msra.mxu0 0.0
          %545 = vmatprep.subr.mxu0 0.0
          %546 = vmatpush1.msra.mxu0 0.0
          %547 = vmatprep.subr.mxu0 0.0
          %548 = vmatpush1.msra.mxu0 0.0
          %549 = vmatprep.subr.mxu0 0.0
          %550 = vmatpush1.msra.mxu0 0.0
          %551 = vmatprep.subr.mxu0 0.0
          %552 = vmatpush1.msra.mxu0 0.0
          %553 = vmatprep.subr.mxu0 0.0
          %554 = vmatpush1.msra.mxu0 0.0
          %555 = vmatprep.subr.mxu0 0.0
          %556 = vmatpush1.msra.mxu0 0.0
          %557 = vmatprep.subr.mxu0 0.0
          %558 = vmatpush1.msra.mxu0 0.0
          %559 = vmatprep.mubr.f32.mxu0 0.0
          %560 = vmatmul.mubr.f32.gmra.mrb[0].mxu0 %v472
          %v561 = vpop.f32.mrb[0].mxu0
          %v562 = vadd.f32 0.0, %v561
          %v563 = vpop.f32.mrb[0].mxu0
          %564 = vmatprep.mubr.f32.mxu0 0.0
          %565 = vmatmul.mubr.f32.gmra.mrb[0].mxu0 %v475
          %v566 = vpop.f32.mrb[0].mxu0
          %v567 = vadd.f32 0.0, %v566
          %v568 = vpop.f32.mrb[0].mxu0
          %569 = vmatprep.mubr.f32.mxu0 0.0
          %570 = vmatmul.mubr.f32.gmra.mrb[0].mxu0 %v478
          %v571 = vpop.f32.mrb[0].mxu0
          %v572 = vadd.f32 0.0, %v571
          %v573 = vpop.f32.mrb[0].mxu0
          %574 = vmatprep.mubr.f32.mxu0 0.0
          %575 = vmatmul.mubr.f32.gmra.mrb[0].mxu0 %v481
          %v576 = vpop.f32.mrb[0].mxu0
          %v577 = vadd.f32 0.0, %v576
          %v578 = vpop.f32.mrb[0].mxu0
          %579 = vmatprep.mubr.f32.mxu0 0.0
          %580 = vmatmul.mubr.f32.gmra.mrb[0].mxu0 %v484
          %v581 = vpop.f32.mrb[0].mxu0
          %v582 = vadd.f32 0.0, %v581
          %v583 = vpop.f32.mrb[0].mxu0
          %584 = vmatprep.mubr.f32.mxu0 0.0
          %585 = vmatmul.mubr.f32.gmra.mrb[0].mxu0 %v487
          %v586 = vpop.f32.mrb[0].mxu0
          %v587 = vadd.f32 0.0, %v586
          %v588 = vpop.f32.mrb[0].mxu0
          %589 = vmatprep.mubr.f32.mxu0 0.0
          %590 = vmatmul.mubr.f32.gmra.mrb[0].mxu0 %v490
          %v591 = vpop.f32.mrb[0].mxu0
          %v592 = vadd.f32 0.0, %v591
          %v593 = vpop.f32.mrb[0].mxu0
          %594 = vmatprep.mubr.f32.mxu0 0.0
          %595 = vmatmul.mubr.f32.gmra.mrb[0].mxu0 %v493
          %v596 = vpop.f32.mrb[0].mxu0
          %v597 = vadd.f32 0.0, %v596
          %v598 = vpop.f32.mrb[0].mxu0
          %599 = vdwg.mxu0
          %s600 = scalar_lea.vmem %s177, %s194 [#allocation7]
          %601 = vst.msk [vmem:[%s600] sm:$0xff] %vm204, %v562
          %602 = vst.msk [vmem:[%s600 + $0x8] sm:$0xff] %vm204, %v567
          %603 = vst.msk [vmem:[%s600 + $0x10] sm:$0xff] %vm204, %v572
          %604 = vst.msk [vmem:[%s600 + $0x18] sm:$0xff] %vm204, %v577
          %605 = vst.msk [vmem:[%s600 + $0x20] sm:$0xff] %vm204, %v582
          %606 = vst.msk [vmem:[%s600 + $0x28] sm:$0xff] %vm204, %v587
          %607 = vst.msk [vmem:[%s600 + $0x30] sm:$0xff] %vm204, %v592
          %608 = vst.msk [vmem:[%s600 + $0x38] sm:$0xff] %vm204, %v597
        $region41: #{tpu_custom_call.1} parent=27 // loop_footer
          %s193 = sadd.s32 1, %s189
        $region42: #{tpu_custom_call.1} parent=27 // loop_footer_branch
          %188 = sbr.rel target = $region38
        $region43: #{tpu_custom_call.1} parent=27 // loop_exit
          _
        %s609 = sand.u32 %s75, 1
        %s610 = scalar_lea.sflag [#allocation4], %s609
        %s611 = sand.u32 %s75, 1
        %s612 = smul.addr %s611, 128
        %s613 = scalar_lea.vmem [#allocation7], %s612
        // Predicated region
        $region44: #{tpu_custom_call.1} parent=27 // pred_check
          %p614 = pneg %p85
        $region45: #{tpu_custom_call.1} parent=27 // pred_check_branch
          %616 = sbr.rel (%p614) target = $region47
        $region46: #{tpu_custom_call.1} parent=27 // pred_region
          %s617 = smul.u32 2, %s20
          %s619 = ssub.s32 2048, 2048
          %620 = vsyncadd %s610, %s619
          %s621 = smul.addr %s617, 8
          %s622 = smul.addr %s621, 128
          %s623 = scalar_lea.hbm %s2, %s622
          %s624 = sshll.u32 %s613, 4
          %s625 = int_to_ptr.vmem [resolvable:$true] %s624
          %630 = dma.vmem_to_hbm [thread:$0]  %s625, 2048, %s623, %s610, 128, 128, 8
        $region47: #{tpu_custom_call.1} parent=27 // pred_fallthru
          _
      $region28: #{tpu_custom_call.1} parent=5 // pred_fallthru
        _
      %p631 = scmp.le.s32.totalorder 2, %s15
      // Predicated region
      $region48: #{tpu_custom_call.1} parent=5 // pred_check
        %p632 = pneg %p631
      $region49: #{tpu_custom_call.1} parent=5 // pred_check_branch
        %634 = sbr.rel (%p632) target = $region51
      $region50: #{tpu_custom_call.1} parent=5 // pred_region
        %s635 = ssub.s32 %s15, 2
        // Predicated region
        $region52: #{tpu_custom_call.1} parent=50 // pred_check
          %p636 = pneg %p91
        $region53: #{tpu_custom_call.1} parent=50 // pred_check_branch
          %638 = sbr.rel (%p636) target = $region55
        $region54: #{tpu_custom_call.1} parent=50 // pred_region
          %s639 = sand.u32 %s76, 1
          %s640 = scalar_lea.sflag [#allocation4], %s639
          %s641 = sand.u32 %s76, 1
          %s642 = smul.addr %s641, 128
          %s643 = scalar_lea.vmem [#allocation7], %s642
          %644 = dma.done %s640, 2048
        $region55: #{tpu_custom_call.1} parent=50 // pred_fallthru
          _
      $region51: #{tpu_custom_call.1} parent=5 // pred_fallthru
        _
    $region6: #{tpu_custom_call.1} parent=1 // loop_footer
      %s19 = sadd.s32 1, %s15
    $region7: #{tpu_custom_call.1} parent=1 // loop_footer_branch
      %14 = sbr.rel target = $region3
    $region8: #{tpu_custom_call.1} parent=1 // loop_exit
      _
    %645 = vsyncpa [#allocation3], 1
    %s646 = scalar_lea.sflag [#allocation3], 1
    %647 = vsyncpa %s646, 1
    %648 = vsyncpa [#allocation6], 1
    %649 = vsyncpa [#allocation4], 1
    %s650 = scalar_lea.sflag [#allocation4], 1
    %651 = vsyncpa %s650, 1

</llo_original>
